<compile_context>
chip_gen: v5e
topology: v5e:2x2
jax: 0.10.0
libtpu: 0.0.40
codegen_flags: <defaults>
</compile_context>

<pallas_src>
import jax
import jax.numpy as jnp
from jax.experimental import pallas as pl
from jax.experimental.pallas import tpu as pltpu


def _round_up(x: int, m: int) -> int:
    return ((x + m - 1) // m) * m


def _device_kind() -> str:
    try:
        return jax.devices()[0].device_kind.lower()
    except Exception:
        return ""


def _linear_kernel(x_ref, w_ref, b_ref, o_ref):
    # x_ref: (TB, F) VMEM; w_ref: (1, F) VMEM; b_ref: (1, 1) SMEM;
    # o_ref: (1, 1, TB) VMEM  (lane-dense row of per-example results).
    prod = x_ref[...].astype(jnp.float32) * w_ref[...].astype(jnp.float32)  # (TB, F)
    acc = jnp.sum(prod, axis=-1, keepdims=True) + b_ref[0, 0]               # (TB, 1) f32
    row = jnp.transpose(acc)                                                # (1, TB) lane-dense
    o_ref[...] = jnp.reshape(row, (1, 1, -1)).astype(o_ref.dtype)


def linear_regression_forward(x, weight, bias):
    """x: (B, F), weight: (1, F) (PyTorch layout), bias: (1,).  Returns (B, 1)."""
    B, F = x.shape
    assert weight.shape == (1, F)
    itemsize = jnp.dtype(x.dtype).itemsize

    # ---- generation-aware VMEM budgets -------------------------------------
    kind = _device_kind()
    if "v7" in kind or "7x" in kind:
        vmem_budget, vmem_limit, min_steps = 24 << 20, 32 << 20, 2   # 64 MiB VMEM, 2 TCs
    elif "v5" in kind or "v6" in kind:
        vmem_budget, vmem_limit, min_steps = 48 << 20, 64 << 20, 1   # 128 MiB VMEM
    else:
        vmem_budget, vmem_limit, min_steps = 24 << 20, 32 << 20, 1   # conservative default

    # ---- choose batch tile by bytes, not by a fixed row cap ----------------
    # Per-row VMEM cost: 2x double-buffered x rows + f32 product temp +
    # 128-lane-padded (TB,1) f32 reduce intermediate + lane-dense row/out.
    bytes_per_row = F * itemsize * 2 + F * 4 + 512 + 16
    rows = max(128, (vmem_budget // bytes_per_row) // 128 * 128)

    if B <= rows:
        tb = B                                   # single full block: always layout-legal
        if min_steps > 1 and B > 256:            # v7x: give both TensorCores work
            tb = _round_up(pl.cdiv(B, min_steps), 128)
    else:
        tb = rows                                # multiple of 128 (lane-dense, 8-aligned)

    num_tiles = pl.cdiv(B, tb)
    bias2d = bias.reshape(1, 1)

    out = pl.pallas_call(
        _linear_kernel,
        out_shape=jax.ShapeDtypeStruct((num_tiles, 1, tb), x.dtype),
        grid_spec=pltpu.PrefetchScalarGridSpec(
            num_scalar_prefetch=0,
            grid=(num_tiles,),
            in_specs=[
                # x: streamed (TB, F) tiles; last block may be partial (no pad).
                pl.BlockSpec((tb, F), lambda i: (i, 0)),
                # weight row: resident (1, F), same block every step.
                pl.BlockSpec((1, F), lambda i: (0, 0)),
                # bias: SMEM scalar, no VMEM tile / DMA padding.
                pl.BlockSpec(memory_space=pltpu.MemorySpace.SMEM),
            ],
            # Lane-dense output: one (1, 1, TB) row per grid step.
            out_specs=pl.BlockSpec((1, 1, tb), lambda i: (i, 0, 0)),
        ),
        compiler_params=pltpu.CompilerParams(
            dimension_semantics=("parallel",),   # sharded across v7x's 2 TCs
            vmem_limit_bytes=vmem_limit,
        ),
    )(x, weight, bias2d)

    # Tail rows (>= B) of the last tile are garbage from the partial x block;
    # they are discarded here.  Never reduce over the padded region.
    return out.reshape(num_tiles * tb)[:B].reshape(B, 1)


if __name__ == "__main__":
    key = jax.random.PRNGKey(0)
    kx, kw, kb = jax.random.split(key, 3)

    batch, n_features = 8, 32

    # Deterministic PyTorch-style init: U(-1/sqrt(F), 1/sqrt(F))
    bound = 1.0 / (n_features ** 0.5)
    weight = jax.random.uniform(kw, (1, n_features), jnp.float32, -bound, bound)
    bias = jax.random.uniform(kb, (1,), jnp.float32, -bound, bound)

    x = jax.random.normal(kx, (batch, n_features), jnp.float32)

    out = linear_regression_forward(x, weight, bias)
    out = jax.block_until_ready(out)

    # Sanity check against plain-JAX reference
    ref = x @ weight.T + bias
    assert out.shape == (batch, 1)
    assert jnp.allclose(out, ref, atol=1e-5, rtol=1e-5)

    print("KERNEL_OK")
</pallas_src>

<mosaic_0001>
module attributes {stable_mosaic.version = 11 : i64} {
  func.func @_linear_kernel(%arg0: i32, %arg1: memref<8x32xf32, #tpu.memory_space<vmem>>, %arg2: memref<1x32xf32, #tpu.memory_space<vmem>>, %arg3: memref<1x1xf32, #tpu.memory_space<smem>>, %arg4: memref<1x1x8xf32, #tpu.memory_space<vmem>>) attributes {dimension_semantics = [#tpu.dimension_semantics<parallel>], iteration_bounds = array<i64: 1>, scalar_prefetch = 0 : i64, scratch_operands = 0 : i64, tpu.core_type = #tpu.core_type<tc>, window_params = [{transform_indices = @transform_0, window_bounds = array<i64: 8, 32>}, {pipeline_mode = #tpu.pipeline_mode<synchronous>, transform_indices = @transform_1, window_bounds = array<i64: 1, 32>}, {transform_indices = @transform_2, window_bounds = array<i64: 1, 1>}, {transform_indices = @transform_3, window_bounds = array<i64: 1, 1, 8>}]} {
    %c0 = arith.constant 0 : index
    %c0_0 = arith.constant 0 : index
    %0 = vector.load %arg1[%c0, %c0_0] : memref<8x32xf32, #tpu.memory_space<vmem>>, vector<8x32xf32>
    %c0_1 = arith.constant 0 : index
    %c0_2 = arith.constant 0 : index
    %1 = vector.load %arg2[%c0_1, %c0_2] : memref<1x32xf32, #tpu.memory_space<vmem>>, vector<1x32xf32>
    %2 = vector.broadcast %1 : vector<1x32xf32> to vector<8x32xf32>
    %3 = arith.mulf %0, %2 : vector<8x32xf32>
    %cst = arith.constant dense<0.000000e+00> : vector<8xf32>
    %4 = vector.multi_reduction <add>, %3, %cst [1] : vector<8x32xf32> to vector<8xf32>
    %5 = vector.shape_cast %4 : vector<8xf32> to vector<8x1xf32>
    %c0_3 = arith.constant 0 : index
    %c0_4 = arith.constant 0 : index
    %6 = memref.load %arg3[%c0_3, %c0_4] : memref<1x1xf32, #tpu.memory_space<smem>>
    %7 = vector.broadcast %6 : f32 to vector<8x1xf32>
    %8 = arith.addf %5, %7 : vector<8x1xf32>
    %9 = tpu.transpose %8, [1, 0] : vector<8x1xf32> -> vector<1x8xf32>
    %10 = vector.shape_cast %9 : vector<1x8xf32> to vector<1x1x8xf32>
    %c0_5 = arith.constant 0 : index
    %c0_6 = arith.constant 0 : index
    %c0_7 = arith.constant 0 : index
    %11 = vector.load %arg4[%c0_5, %c0_6, %c0_7] : memref<1x1x8xf32, #tpu.memory_space<vmem>>, vector<1x1x8xf32>
    tpu.vector_store %arg4[%c0_5, %c0_6, %c0_7], %10 {strides = array<i32>} : memref<1x1x8xf32, #tpu.memory_space<vmem>>, vector<1x1x8xf32>,
    return
  }
  func.func @transform_0(%arg0: i32) -> (i32, i32) {
    %c0_i32 = arith.constant 0 : i32
    %c0_i32_0 = arith.constant 0 : i32
    return %arg0, %c0_i32 : i32, i32
  }
  func.func @transform_1(%arg0: i32) -> (i32, i32) {
    %c0_i32 = arith.constant 0 : i32
    %c0_i32_0 = arith.constant 0 : i32
    %c0_i32_1 = arith.constant 0 : i32
    return %c0_i32, %c0_i32_0 : i32, i32
  }
  func.func @transform_2(%arg0: i32) -> (i32, i32) {
    %c0_i32 = arith.constant 0 : i32
    %c0_i32_0 = arith.constant 0 : i32
    %c0_i32_1 = arith.constant 0 : i32
    return %c0_i32, %c0_i32_0 : i32, i32
  }
  func.func @transform_3(%arg0: i32) -> (i32, i32, i32) {
    %c0_i32 = arith.constant 0 : i32
    %c0_i32_0 = arith.constant 0 : i32
    %c0_i32_1 = arith.constant 0 : i32
    return %arg0, %c0_i32, %c0_i32_0 : i32, i32, i32
  }
}

</mosaic_0001>

<llo_original>
// kernel: tpu_custom_call.1
$region0: #{tpu_custom_call.1}
  #allocation0 [shape = 'u32[]', space=smem, size = 0x4, offset = 0x4, fixed_abs, tag = 'smem constant byte address 0x4 - core index']
  #allocation1 [shape = 'u32[72,128]{1,0:T(1,128)}', space=vmem, size = 0x9000, scoped, tag = 'internal scratch']
  #allocation2 [shape = 'f32[1,1]{1,0:T(1,128)S(6)}', space=smem, size = 0x200, scoped, tag = 'scoped memory for tpu_custom_call.1']
  %s0 = inlined_call_operand.hbm [shape: f32[8,32], index: 0, kind: input, shape index: {}]
  %s1 = inlined_call_operand.vmem [shape: f32[1,32], index: 1, kind: input, shape index: {}]
  %s2 = inlined_call_operand.<no memory space> [shape: f32[1,1], index: 2, kind: input, shape index: {}]
  %s3 = inlined_call_operand.hbm [shape: f32[1,1,8], index: 3, kind: output, shape index: {}]
  %s4 = sld [smem:[#allocation0]]
  $region26: #{tpu_custom_call.1} parent=0
    _
  %s6 = ssub.s32 1, %s4
  %s7 = scalar_select 0, %s6, %s4
  %8 = sst [smem:[#allocation2]] %s2
  $region1: #{tpu_custom_call.1} parent=0
    #allocation3 [shape = 'u8[4096]{0}', space=vmem, size = 0x1000, scoped, tag = 'input window, operand 0, single buffered']
    #allocation4 [shape = 's32[1]{0}', space=sflag, size = 0x4, scoped, tag = 'scoped memory for tpu_custom_call.1']
    #allocation5 [shape = 's32[1]{0}', space=sflag, size = 0x4, scoped, tag = 'scoped memory for tpu_custom_call.1']
    #allocation6 [shape = 'u8[512]{0}', space=vmem, size = 0x400, scoped, tag = 'output window, operand 0, single buffered']
    %9 = vsyncpa [#allocation4], 0
    %10 = vsyncpa [#allocation5], 0
    // Predicated region
    $region2: #{tpu_custom_call.1} parent=1 // pred_check
      _
    $region3: #{tpu_custom_call.1} parent=1 // pred_check_branch
      %12 = sbr.rel (0) target = $region5
    $region4: #{tpu_custom_call.1} parent=1 // pred_region
      %14 = vsyncadd [#allocation4], 0
      %s16 = sshll.u32 %s0, 4
      %s17 = int_to_ptr.hbm [resolvable:$true] %s16
      %s18 = sshll.u32 [#allocation3], 4
      %s19 = int_to_ptr.vmem [resolvable:$true] %s18
      %21 = dma.hbm_to_vmem [thread:$0]  %s17, 128, %s19, [#allocation4]
    $region5: #{tpu_custom_call.1} parent=1 // pred_fallthru
      _
    // Predicated region
    $region6: #{tpu_custom_call.1} parent=1 // pred_check
      _
    $region7: #{tpu_custom_call.1} parent=1 // pred_check_branch
      %23 = sbr.rel (0) target = $region9
    $region8: #{tpu_custom_call.1} parent=1 // pred_region
      _
    $region9: #{tpu_custom_call.1} parent=1 // pred_fallthru
      _
    // Predicated region
    $region10: #{tpu_custom_call.1} parent=1 // pred_check
      _
    $region11: #{tpu_custom_call.1} parent=1 // pred_check_branch
      %25 = sbr.rel (0) target = $region13
    $region12: #{tpu_custom_call.1} parent=1 // pred_region
      _
    $region13: #{tpu_custom_call.1} parent=1 // pred_fallthru
      _
    // Predicated region
    $region14: #{tpu_custom_call.1} parent=1 // pred_check
      _
    $region15: #{tpu_custom_call.1} parent=1 // pred_check_branch
      %27 = sbr.rel (0) target = $region17
    $region16: #{tpu_custom_call.1} parent=1 // pred_region
      %29 = dma.done [#allocation4], 128
    $region17: #{tpu_custom_call.1} parent=1 // pred_fallthru
      _
    %v30 = vld [vmem:[#allocation3] sm:$0xff]
    %v31 = vld [vmem:[%s1] sm:$0x1]
    %v33 = vperm.slane %v31, 0
    %v35 = vmul.f32 %v30, %v33
    %vm36 = vcmask 261120
    %v37 = vsel %vm36, %v35, 0.0
    %38 = vadd.xlane.f32.xlu0 %v37
    %v39 = vpop.xlane.xlu0 %38
    %s40 = sld [smem:[#allocation2]]
    %v41 = vstv %s40
    %v42 = vadd.f32 %v39, %v41
    %43 = vxpose.xlu0.b32.start [1/16] %v42, 128
    %44 = vxpose.xlu0.b32.cont [2/16] 0.0, 128
    %45 = vxpose.xlu0.b32.cont [3/16] 0.0, 128
    %46 = vxpose.xlu0.b32.cont [4/16] 0.0, 128
    %47 = vxpose.xlu0.b32.cont [5/16] 0.0, 128
    %48 = vxpose.xlu0.b32.cont [6/16] 0.0, 128
    %49 = vxpose.xlu0.b32.cont [7/16] 0.0, 128
    %50 = vxpose.xlu0.b32.cont [8/16] 0.0, 128
    %51 = vxpose.xlu0.b32.cont [9/16] 0.0, 128
    %52 = vxpose.xlu0.b32.cont [10/16] 0.0, 128
    %53 = vxpose.xlu0.b32.cont [11/16] 0.0, 128
    %54 = vxpose.xlu0.b32.cont [12/16] 0.0, 128
    %55 = vxpose.xlu0.b32.cont [13/16] 0.0, 128
    %56 = vxpose.xlu0.b32.cont [14/16] 0.0, 128
    %57 = vxpose.xlu0.b32.cont [15/16] 0.0, 128
    %58 = vxpose.xlu0.b32.end [16/16] 0.0, 128
    %v59 = vpop.trf.xlu0
    %v60 = vpop.trf.xlu0
    %v61 = vpop.trf.xlu0
    %v62 = vpop.trf.xlu0
    %v63 = vpop.trf.xlu0
    %v64 = vpop.trf.xlu0
    %v65 = vpop.trf.xlu0
    %v66 = vpop.trf.xlu0
    %v67 = vpop.trf.xlu0
    %v68 = vpop.trf.xlu0
    %v69 = vpop.trf.xlu0
    %v70 = vpop.trf.xlu0
    %v71 = vpop.trf.xlu0
    %v72 = vpop.trf.xlu0
    %v73 = vpop.trf.xlu0
    %v74 = vpop.trf.xlu0
    %vm75 = vcmask 57344
    %76 = vst.msk [vmem:[#allocation6] sm:$0x1] %vm75, %v59
    // Predicated region
    $region18: #{tpu_custom_call.1} parent=1 // pred_check
      _
    $region19: #{tpu_custom_call.1} parent=1 // pred_check_branch
      %78 = sbr.rel (0) target = $region21
    $region20: #{tpu_custom_call.1} parent=1 // pred_region
      %80 = vsyncadd [#allocation5], 0
      %s82 = sshll.u32 [#allocation6], 4
      %s83 = int_to_ptr.vmem [resolvable:$true] %s82
      %s84 = sshll.u32 %s3, 4
      %s85 = int_to_ptr.hbm [resolvable:$true] %s84
      %87 = dma.vmem_to_hbm [thread:$0]  %s83, 16, %s85, [#allocation5]
    $region21: #{tpu_custom_call.1} parent=1 // pred_fallthru
      _
    // Predicated region
    $region22: #{tpu_custom_call.1} parent=1 // pred_check
      _
    $region23: #{tpu_custom_call.1} parent=1 // pred_check_branch
      %89 = sbr.rel (0) target = $region25
    $region24: #{tpu_custom_call.1} parent=1 // pred_region
      %91 = dma.done [#allocation5], 16
    $region25: #{tpu_custom_call.1} parent=1 // pred_fallthru
      _
    %92 = vsyncpa [#allocation4], 1
    %93 = vsyncpa [#allocation5], 1

</llo_original>
